<compile_context>
chip_gen: v5e
topology: v5e:2x2
jax: 0.10.0
libtpu: 0.0.40
codegen_flags: <defaults>
</compile_context>

<pallas_src>
import functools

import jax
import jax.numpy as jnp
from jax.experimental import pallas as pl
from jax.experimental.pallas import tpu as pltpu

_LANES = 128
_MIN_TILE_PR = 16       # bf16 sublane tile; minimum packed-row tile
_NEG_BIG = -1.0e9       # pred pad value: exp() underflows to exactly 0
_CLS_CLAMP = 60.0       # class-CE clamp (see header note)


def _cdiv(a, b):
    return -(-a // b)


def _round_up(x, m):
    return _cdiv(x, m) * m


def _split_bf16(x):
    """2-term bf16 split of an f32 array: x ~= hi + lo (~16-bit accurate)."""
    hi = x.astype(jnp.bfloat16)
    lo = (x - hi.astype(jnp.float32)).astype(jnp.bfloat16)
    return hi, lo


def _furniture_loss_kernel(preds_ref, targets_ref, seg_ref, lane_ref,
                           out_ref, acc_ref, *, tile_pr):
    """One (tile_pr, 128) packed tile.

    Lane l of packed row r holds feature (l % group) of logical row
    r * (128 // group) + l // group.  Feature slots: 0,1 = xy location,
    2 = rotation logit, 3.. = class logits (targets one-hot).
    Masked per-lane contributions are folded to (8, 128) per step and
    accumulated into a tiny resident scratch; the output is written once,
    at the last grid step of each split.
    """
    i = pl.program_id(1)
    T = tile_pr

    @pl.when(i == 0)
    def _init():
        acc_ref[...] = jnp.zeros_like(acc_ref)

    p = preds_ref[...].astype(jnp.float32)      # (T, 128)
    t = targets_ref[...].astype(jnp.float32)    # (T, 128)
    seg = seg_ref[...]                          # (128, 128) bf16, 0/1 block-diag
    sels = lane_ref[...]                        # (8, 128) f32 lane selectors

    sel_loc = sels[0:1]     # feature slots 0,1  (x, y)
    sel_rot = sels[1:2]     # slot 2             (rotation logit)
    sel_cls = sels[2:3]     # slot 3             (CE term lands here)
    sel_cnt = sels[3:4]     # slot 4             (valid-row counter)
    is_cls = sels[4:5]      # slots 3..D-1       (class logits)
    sel_v0 = sels[5:6]      # slot 0             (valid-flag source lane)

    # ---- fused MXU call #1: per-row valid mask + target logit -------------
    # X @ seg = segmented row-sum broadcast back to every lane of the row's
    # lane group.  valid mask is 0/1 (exact in bf16); the target logit uses a
    # 2-term hi/lo split against the exact 0/1 RHS (no RHS split needed).
    # TODO(synk): on v5e the valid-mask broadcast could move to XLU rolls.
    pt = p * t
    valid_b = (sel_v0 * (t != -1.0).astype(jnp.float32)).astype(jnp.bfloat16)
    pt_hi, pt_lo = _split_bf16(is_cls * pt)     # one-hot targets: one nz/group
    r1 = jnp.dot(jnp.concatenate([valid_b, pt_hi, pt_lo], axis=0), seg,
                 preferred_element_type=jnp.float32)        # (3T, 128)
    mask = r1[0:T]                              # 1.0 valid row, 0.0 otherwise
    tgt = r1[T:2 * T] + r1[2 * T:3 * T]         # target logit, group-broadcast

    # ---- one fused exp: rot lane gets -|x| (BCE-with-logits), class lanes
    # get clamp(logit - target_logit, 60).  The clamp keeps exp finite for any
    # input (incl. padded/invalid rows), so no extra masking is needed here.
    arg = sel_rot * (-jnp.abs(p)) + is_cls * jnp.minimum(p - tgt, _CLS_CLAMP)
    e = jnp.exp(arg)

    # ---- fused MXU call #2: per-row sum of non-target exponentials --------
    e_hi, e_lo = _split_bf16(is_cls * ((1.0 - t) * e))
    r2 = jnp.dot(jnp.concatenate([e_hi, e_lo], axis=0), seg,
                 preferred_element_type=jnp.float32)        # (2T, 128)
    seg_sum = r2[0:T] + r2[T:2 * T]

    # One fused log (EUP): slot 2 -> log(1 + exp(-|x|)); slot 3 ->
    # log(1 + sum_{j != target} exp(p_j - p_t)) = lse - target_logit (valid for
    # strict one-hot targets); all other lanes -> log(1) = 0.
    lg = jnp.log(1.0 + sel_rot * e + sel_cls * seg_sum)

    diff = p - t
    contrib = (sel_loc * (diff * diff)                 # slots 0,1: sq loc err
               + sel_rot * (jnp.maximum(p, 0.0) - pt)  # slot 2: BCE w/ logits
               + sel_cnt                               # slot 4: valid count
               + lg)                                   # slots 2,3: log terms

    # Fold (T,128) -> (8,128) in-register (pure cross-vreg adds) and
    # accumulate into the 4 KiB resident scratch.  Padded/invalid rows carry
    # large-but-finite contrib values that the 0/1 mask zeroes exactly.
    acc_ref[...] += jnp.sum((mask * contrib).reshape(T // 8, 8, _LANES),
                            axis=0)

    @pl.when(i == pl.num_programs(1) - 1)
    def _finalize():
        out_ref[0] = acc_ref[...]


def furniture_loss(preds, targets, *, tile_packed_rows=2048):
    """Pallas forward pass of FurnitureLoss.

    preds, targets: (B, N, 3 + C) with matching shapes.
    Returns (loc_loss * 0.1, rot_loss, cls_loss, total_loss), like the module.
    """
    if preds.shape != targets.shape:
        raise ValueError("preds and targets must have the same shape")
    B, N, D = preds.shape
    if D > _LANES:
        # TODO(synk): support >125 classes by tiling the feature axis as well.
        raise NotImplementedError("feature dim > 128 not supported")

    # Smallest power-of-two group (>= 8) that holds all features; divides 128.
    group = 8
    while group < D:
        group *= 2
    rows_per_pack = _LANES // group

    R = B * N
    p2 = preds.reshape(R, D)
    t2 = targets.reshape(R, D)
    if D < group:   # feature padding (no-op for the 5-class module: D == 8)
        p2 = jnp.pad(p2, ((0, 0), (0, group - D)), constant_values=_NEG_BIG)
        t2 = jnp.pad(t2, ((0, 0), (0, group - D)), constant_values=0.0)

    pr = _cdiv(R, rows_per_pack)
    # Leading "parallel" grid axis: engages both TensorCores/DMA paths on v7x,
    # harmless sequential loop on single-core v5e/v6e.  Skipped for tiny
    # inputs to avoid a purely padded second split.
    # TODO(synk): make this generation-aware (pltpu.get_tpu_info) and evaluate
    # CORE_PARALLEL semantics for the split axis on v7x.
    num_splits = 2 if pr >= 2 * _MIN_TILE_PR else 1

    tile_pr = _round_up(min(tile_packed_rows, _cdiv(pr, num_splits)),
                        _MIN_TILE_PR)
    nblocks = _cdiv(pr, num_splits * tile_pr)
    pr_padded = num_splits * nblocks * tile_pr
    r_padded = pr_padded * rows_per_pack
    if r_padded > R:   # padded rows are marked invalid and contribute nothing
        p2 = jnp.pad(p2, ((0, r_padded - R), (0, 0)), constant_values=_NEG_BIG)
        t2 = jnp.pad(t2, ((0, r_padded - R), (0, 0)), constant_values=-1.0)

    # Free, layout-preserving repack: (r_padded, group) -> (pr_padded, 128).
    p_packed = p2.reshape(pr_padded, _LANES)
    t_packed = t2.reshape(pr_padded, _LANES)
    # TODO(synk): optionally stream p_packed/t_packed as bf16 on v5e (halves
    # HBM traffic) once the bf16 loc-MSE tolerance is signed off.

    # Hoisted per-call constants (review #1): block-diagonal segment matrix
    # and (1,128) lane-selector masks, resident in VMEM across the whole grid.
    lanes = jnp.arange(_LANES, dtype=jnp.int32)
    d = lanes % group
    seg_mat = (lanes[:, None] // group == lanes[None, :] // group
               ).astype(jnp.bfloat16)                                # (128,128)
    lane_consts = jnp.stack([
        (d < 2), (d == 2), (d == 3), (d == 4),
        jnp.logical_and(d >= 3, d < D), (d == 0),
        jnp.zeros_like(d, dtype=bool), jnp.zeros_like(d, dtype=bool),
    ]).astype(jnp.float32)                                           # (8, 128)

    kernel = functools.partial(_furniture_loss_kernel, tile_pr=tile_pr)
    out = pl.pallas_call(
        kernel,
        out_shape=jax.ShapeDtypeStruct((num_splits, 8, _LANES), jnp.float32),
        grid_spec=pltpu.PrefetchScalarGridSpec(
            num_scalar_prefetch=0,
            grid=(num_splits, nblocks),
            in_specs=[
                pl.BlockSpec((tile_pr, _LANES),
                             lambda c, i: (c * nblocks + i, 0)),
                pl.BlockSpec((tile_pr, _LANES),
                             lambda c, i: (c * nblocks + i, 0)),
                pl.BlockSpec((_LANES, _LANES), lambda c, i: (0, 0)),  # seg_mat
                pl.BlockSpec((8, _LANES), lambda c, i: (0, 0)),       # selectors
            ],
            out_specs=pl.BlockSpec((1, 8, _LANES), lambda c, i: (c, 0, 0)),
            scratch_shapes=[pltpu.VMEM((8, _LANES), jnp.float32)],
        ),
        compiler_params=pltpu.CompilerParams(
            dimension_semantics=("parallel", "arbitrary"),
            vmem_limit_bytes=48 * 1024 * 1024,   # headroom on v7x's 64 MiB VMEM
        ),
    )(p_packed, t_packed, seg_mat, lane_consts)

    # Tiny glue: fold per-lane column sums into per-feature-slot sums.
    per_lane = jnp.sum(out.reshape(num_splits * 8, _LANES), axis=0)      # (128,)
    per_feat = jnp.sum(per_lane.reshape(rows_per_pack, group), axis=0)   # (group,)
    loc_sum = per_feat[0] + per_feat[1]
    rot_sum = per_feat[2]
    cls_sum = per_feat[3]
    count = per_feat[4]
    # NOTE: count == 0 (no valid rows) yields NaN, matching torch masked_select.
    loc_loss = loc_sum / (2.0 * count)   # F.mse_loss averages over M rows * 2
    rot_loss = rot_sum / count
    cls_loss = cls_sum / count
    total_loss = loc_loss + rot_loss + cls_loss
    return (loc_loss * 0.1, rot_loss, cls_loss, total_loss)


def _reference_loss(preds, targets):
    # Pure-JAX reference mirroring the masked-select semantics via weights.
    mask = (targets[..., 0] != -1.0).astype(jnp.float32)
    cnt = jnp.sum(mask)
    diff = preds[..., 0:2] - targets[..., 0:2]
    loc = jnp.sum(mask * jnp.sum(diff * diff, axis=-1)) / (2.0 * cnt)
    x = preds[..., 2]
    y = targets[..., 2]
    rot = jnp.sum(mask * (jnp.maximum(x, 0.0) - x * y
                          + jnp.log1p(jnp.exp(-jnp.abs(x))))) / cnt
    pc = preds[..., 3:]
    tc = targets[..., 3:]
    idx = jnp.argmax(tc, axis=-1)
    m = jnp.max(pc, axis=-1)
    lse = jnp.log(jnp.sum(jnp.exp(pc - m[..., None]), axis=-1)) + m
    tgt = jnp.take_along_axis(pc, idx[..., None], axis=-1)[..., 0]
    cls = jnp.sum(mask * (lse - tgt)) / cnt
    return (loc * 0.1, rot, cls, loc + rot + cls)


if __name__ == "__main__":
    # Deterministic "specs" (the preset_sizes buffer is unused in forward; it
    # only fixes the number of classes).
    specs = {
        "chair": {"size": 1.0},
        "table": {"size": 2.0},
        "sofa": {"size": 3.0},
        "bed": {"size": 4.0},
        "lamp": {"size": 0.5},
    }
    preset_sizes = jnp.asarray([v["size"] for v in specs.values()], jnp.float32)
    C = preset_sizes.shape[0]          # 5 classes
    D = 3 + C                          # [x, y, rot, 5 class logits] = 8
    B, N = 2, 8

    key = jax.random.PRNGKey(0)
    k1, k2, k3, k4, k5 = jax.random.split(key, 5)

    preds = jax.random.normal(k1, (B, N, D), dtype=jnp.float32)

    loc = jax.random.uniform(k2, (B, N, 2), dtype=jnp.float32)
    rot = jax.random.bernoulli(k3, 0.5, (B, N)).astype(jnp.float32)
    cls_idx = jax.random.randint(k4, (B, N), 0, C)
    onehot = jax.nn.one_hot(cls_idx, C, dtype=jnp.float32)
    targets = jnp.concatenate([loc, rot[..., None], onehot], axis=-1)

    # Mark ~30% of rows invalid by setting targets[..., 0] = -1.
    invalid = jax.random.bernoulli(k5, 0.3, (B, N))
    targets = targets.at[..., 0].set(jnp.where(invalid, -1.0, targets[..., 0]))

    loss_fn = jax.jit(furniture_loss)
    out = loss_fn(preds, targets)
    out = jax.block_until_ready(out)

    ref = _reference_loss(preds, targets)
    # Tolerance 2e-5: the hi/lo (2-term bf16) split of the broadcast matmuls
    # is ~16-bit accurate per element; the log/softplus compress it so the
    # observed error on the scalar losses is ~1e-6, well inside this bound.
    for o, r in zip(out, ref):
        assert jnp.allclose(o, r, atol=2e-5, rtol=2e-5), (o, r)

    print("KERNEL_OK")
</pallas_src>

<mosaic_0001>
module attributes {stable_mosaic.version = 11 : i64} {
  func.func @_furniture_loss_kernel(%arg0: i32, %arg1: i32, %arg2: memref<16x128xf32, #tpu.memory_space<vmem>>, %arg3: memref<16x128xf32, #tpu.memory_space<vmem>>, %arg4: memref<128x128xbf16, #tpu.memory_space<vmem>>, %arg5: memref<8x128xf32, #tpu.memory_space<vmem>>, %arg6: memref<1x8x128xf32, #tpu.memory_space<vmem>>, %arg7: memref<8x128xf32, #tpu.memory_space<vmem>>) attributes {dimension_semantics = [#tpu.dimension_semantics<parallel>, #tpu.dimension_semantics<arbitrary>], iteration_bounds = array<i64: 1, 1>, scalar_prefetch = 0 : i64, scratch_operands = 1 : i64, tpu.core_type = #tpu.core_type<tc>, window_params = [{transform_indices = @transform_0, window_bounds = array<i64: 16, 128>}, {transform_indices = @transform_1, window_bounds = array<i64: 16, 128>}, {pipeline_mode = #tpu.pipeline_mode<synchronous>, transform_indices = @transform_2, window_bounds = array<i64: 128, 128>}, {pipeline_mode = #tpu.pipeline_mode<synchronous>, transform_indices = @transform_3, window_bounds = array<i64: 8, 128>}, {transform_indices = @transform_4, window_bounds = array<i64: 1, 8, 128>}]} {
    %c0_i32 = arith.constant 0 : i32
    %0 = arith.cmpi eq, %arg1, %c0_i32 : i32
    %1 = arith.extui %0 : i1 to i32
    %c0_i32_0 = arith.constant 0 : i32
    %2 = arith.cmpi ne, %1, %c0_i32_0 : i32
    scf.if %2 {
      %cst_22 = arith.constant 0.000000e+00 : f32
      %89 = vector.broadcast %cst_22 : f32 to vector<8x128xf32>
      %c0_23 = arith.constant 0 : index
      %c0_24 = arith.constant 0 : index
      %90 = vector.load %arg7[%c0_23, %c0_24] : memref<8x128xf32, #tpu.memory_space<vmem>>, vector<8x128xf32>
      tpu.vector_store %arg7[%c0_23, %c0_24], %89 {strides = array<i32>} : memref<8x128xf32, #tpu.memory_space<vmem>>, vector<8x128xf32>,
    } else {
    }
    %c0 = arith.constant 0 : index
    %c0_1 = arith.constant 0 : index
    %3 = vector.load %arg2[%c0, %c0_1] : memref<16x128xf32, #tpu.memory_space<vmem>>, vector<16x128xf32>
    %c0_2 = arith.constant 0 : index
    %c0_3 = arith.constant 0 : index
    %4 = vector.load %arg3[%c0_2, %c0_3] : memref<16x128xf32, #tpu.memory_space<vmem>>, vector<16x128xf32>
    %c0_4 = arith.constant 0 : index
    %c0_5 = arith.constant 0 : index
    %5 = vector.load %arg4[%c0_4, %c0_5] : memref<128x128xbf16, #tpu.memory_space<vmem>>, vector<128x128xbf16>
    %c0_6 = arith.constant 0 : index
    %c0_7 = arith.constant 0 : index
    %6 = vector.load %arg5[%c0_6, %c0_7] : memref<8x128xf32, #tpu.memory_space<vmem>>, vector<8x128xf32>
    %7 = vector.extract_strided_slice %6 {offsets = [0, 0], sizes = [1, 128], strides = [1, 1]} : vector<8x128xf32> to vector<1x128xf32>
    %8 = vector.extract_strided_slice %6 {offsets = [1, 0], sizes = [1, 128], strides = [1, 1]} : vector<8x128xf32> to vector<1x128xf32>
    %9 = vector.extract_strided_slice %6 {offsets = [2, 0], sizes = [1, 128], strides = [1, 1]} : vector<8x128xf32> to vector<1x128xf32>
    %10 = vector.extract_strided_slice %6 {offsets = [3, 0], sizes = [1, 128], strides = [1, 1]} : vector<8x128xf32> to vector<1x128xf32>
    %11 = vector.extract_strided_slice %6 {offsets = [4, 0], sizes = [1, 128], strides = [1, 1]} : vector<8x128xf32> to vector<1x128xf32>
    %12 = vector.extract_strided_slice %6 {offsets = [5, 0], sizes = [1, 128], strides = [1, 1]} : vector<8x128xf32> to vector<1x128xf32>
    %13 = arith.mulf %3, %4 : vector<16x128xf32>
    %cst = arith.constant -1.000000e+00 : f32
    %14 = vector.broadcast %cst : f32 to vector<16x128xf32>
    %15 = arith.cmpf one, %4, %14 : vector<16x128xf32>
    %16 = arith.extui %15 : vector<16x128xi1> to vector<16x128xi32>
    %17 = arith.sitofp %16 : vector<16x128xi32> to vector<16x128xf32>
    %18 = vector.broadcast %12 : vector<1x128xf32> to vector<16x128xf32>
    %19 = arith.mulf %18, %17 : vector<16x128xf32>
    %20 = arith.truncf %19 : vector<16x128xf32> to vector<16x128xbf16>
    %21 = vector.broadcast %11 : vector<1x128xf32> to vector<16x128xf32>
    %22 = arith.mulf %21, %13 : vector<16x128xf32>
    %23 = arith.truncf %22 : vector<16x128xf32> to vector<16x128xbf16>
    %24 = arith.extf %23 : vector<16x128xbf16> to vector<16x128xf32>
    %25 = arith.subf %22, %24 : vector<16x128xf32>
    %26 = arith.truncf %25 : vector<16x128xf32> to vector<16x128xbf16>
    %27 = tpu.concatenate %20, %23, %26 in 0 : vector<16x128xbf16>, vector<16x128xbf16>, vector<16x128xbf16> -> vector<48x128xbf16>
    %cst_8 = arith.constant dense<0.000000e+00> : vector<48x128xf32>
    %28 = tpu.matmul %27, %5, %cst_8 {dimension_numbers = #tpu.dot_dimension_numbers<[1], [0], [0], [1], [0, 0, 1, 1], [], []>} : vector<48x128xbf16>, vector<128x128xbf16>, vector<48x128xf32> -> vector<48x128xf32>
    %29 = vector.extract_strided_slice %28 {offsets = [0, 0], sizes = [16, 128], strides = [1, 1]} : vector<48x128xf32> to vector<16x128xf32>
    %30 = vector.extract_strided_slice %28 {offsets = [16, 0], sizes = [16, 128], strides = [1, 1]} : vector<48x128xf32> to vector<16x128xf32>
    %31 = vector.extract_strided_slice %28 {offsets = [32, 0], sizes = [16, 128], strides = [1, 1]} : vector<48x128xf32> to vector<16x128xf32>
    %32 = arith.addf %30, %31 : vector<16x128xf32>
    %33 = math.absf %3 : vector<16x128xf32>
    %cst_9 = arith.constant 0.000000e+00 : f32
    %34 = vector.broadcast %cst_9 : f32 to vector<16x128xf32>
    %35 = arith.subf %34, %33 : vector<16x128xf32>
    %36 = vector.broadcast %8 : vector<1x128xf32> to vector<16x128xf32>
    %37 = arith.mulf %36, %35 : vector<16x128xf32>
    %38 = arith.subf %3, %32 : vector<16x128xf32>
    %cst_10 = arith.constant 6.000000e+01 : f32
    %39 = vector.broadcast %cst_10 : f32 to vector<16x128xf32>
    %40 = arith.minimumf %38, %39 : vector<16x128xf32>
    %41 = vector.broadcast %11 : vector<1x128xf32> to vector<16x128xf32>
    %42 = arith.mulf %41, %40 : vector<16x128xf32>
    %43 = arith.addf %37, %42 : vector<16x128xf32>
    %44 = math.exp %43 : vector<16x128xf32>
    %cst_11 = arith.constant 1.000000e+00 : f32
    %45 = vector.broadcast %cst_11 : f32 to vector<16x128xf32>
    %46 = arith.subf %45, %4 : vector<16x128xf32>
    %47 = arith.mulf %46, %44 : vector<16x128xf32>
    %48 = vector.broadcast %11 : vector<1x128xf32> to vector<16x128xf32>
    %49 = arith.mulf %48, %47 : vector<16x128xf32>
    %50 = arith.truncf %49 : vector<16x128xf32> to vector<16x128xbf16>
    %51 = arith.extf %50 : vector<16x128xbf16> to vector<16x128xf32>
    %52 = arith.subf %49, %51 : vector<16x128xf32>
    %53 = arith.truncf %52 : vector<16x128xf32> to vector<16x128xbf16>
    %54 = tpu.concatenate %50, %53 in 0 : vector<16x128xbf16>, vector<16x128xbf16> -> vector<32x128xbf16>
    %cst_12 = arith.constant dense<0.000000e+00> : vector<32x128xf32>
    %55 = tpu.matmul %54, %5, %cst_12 {dimension_numbers = #tpu.dot_dimension_numbers<[1], [0], [0], [1], [0, 0, 1, 1], [], []>} : vector<32x128xbf16>, vector<128x128xbf16>, vector<32x128xf32> -> vector<32x128xf32>
    %56 = vector.extract_strided_slice %55 {offsets = [0, 0], sizes = [16, 128], strides = [1, 1]} : vector<32x128xf32> to vector<16x128xf32>
    %57 = vector.extract_strided_slice %55 {offsets = [16, 0], sizes = [16, 128], strides = [1, 1]} : vector<32x128xf32> to vector<16x128xf32>
    %58 = arith.addf %56, %57 : vector<16x128xf32>
    %59 = vector.broadcast %8 : vector<1x128xf32> to vector<16x128xf32>
    %60 = arith.mulf %59, %44 : vector<16x128xf32>
    %cst_13 = arith.constant 1.000000e+00 : f32
    %61 = vector.broadcast %cst_13 : f32 to vector<16x128xf32>
    %62 = arith.addf %61, %60 : vector<16x128xf32>
    %63 = vector.broadcast %9 : vector<1x128xf32> to vector<16x128xf32>
    %64 = arith.mulf %63, %58 : vector<16x128xf32>
    %65 = arith.addf %62, %64 : vector<16x128xf32>
    %66 = math.log %65 : vector<16x128xf32>
    %67 = arith.subf %3, %4 : vector<16x128xf32>
    %68 = arith.mulf %67, %67 : vector<16x128xf32>
    %69 = vector.broadcast %7 : vector<1x128xf32> to vector<16x128xf32>
    %70 = arith.mulf %69, %68 : vector<16x128xf32>
    %cst_14 = arith.constant 0.000000e+00 : f32
    %71 = vector.broadcast %cst_14 : f32 to vector<16x128xf32>
    %72 = arith.maximumf %3, %71 : vector<16x128xf32>
    %73 = arith.subf %72, %13 : vector<16x128xf32>
    %74 = vector.broadcast %8 : vector<1x128xf32> to vector<16x128xf32>
    %75 = arith.mulf %74, %73 : vector<16x128xf32>
    %76 = arith.addf %70, %75 : vector<16x128xf32>
    %77 = vector.broadcast %10 : vector<1x128xf32> to vector<16x128xf32>
    %78 = arith.addf %76, %77 : vector<16x128xf32>
    %79 = arith.addf %78, %66 : vector<16x128xf32>
    %c0_15 = arith.constant 0 : index
    %c0_16 = arith.constant 0 : index
    %80 = vector.load %arg7[%c0_15, %c0_16] : memref<8x128xf32, #tpu.memory_space<vmem>>, vector<8x128xf32>
    %81 = arith.mulf %29, %79 : vector<16x128xf32>
    %82 = vector.shape_cast %81 : vector<16x128xf32> to vector<2x8x128xf32>
    %cst_17 = arith.constant dense<0.000000e+00> : vector<8x128xf32>
    %83 = vector.multi_reduction <add>, %82, %cst_17 [0] : vector<2x8x128xf32> to vector<8x128xf32>
    %84 = arith.addf %80, %83 : vector<8x128xf32>
    %c0_18 = arith.constant 0 : index
    %c0_19 = arith.constant 0 : index
    %85 = vector.load %arg7[%c0_18, %c0_19] : memref<8x128xf32, #tpu.memory_space<vmem>>, vector<8x128xf32>
    tpu.vector_store %arg7[%c0_18, %c0_19], %84 {strides = array<i32>} : memref<8x128xf32, #tpu.memory_space<vmem>>, vector<8x128xf32>,
    %c0_i32_20 = arith.constant 0 : i32
    %86 = arith.cmpi eq, %arg1, %c0_i32_20 : i32
    %87 = arith.extui %86 : i1 to i32
    %c0_i32_21 = arith.constant 0 : i32
    %88 = arith.cmpi ne, %87, %c0_i32_21 : i32
    scf.if %88 {
      %c0_22 = arith.constant 0 : index
      %c0_23 = arith.constant 0 : index
      %89 = vector.load %arg7[%c0_22, %c0_23] : memref<8x128xf32, #tpu.memory_space<vmem>>, vector<8x128xf32>
      %c0_24 = arith.constant 0 : index
      %c0_25 = arith.constant 0 : index
      %c0_26 = arith.constant 0 : index
      %90 = vector.load %arg6[%c0_24, %c0_25, %c0_26] : memref<1x8x128xf32, #tpu.memory_space<vmem>>, vector<1x8x128xf32>
      %91 = vector.shape_cast %90 : vector<1x8x128xf32> to vector<8x128xf32>
      %92 = vector.shape_cast %89 : vector<8x128xf32> to vector<1x8x128xf32>
      tpu.vector_store %arg6[%c0_24, %c0_25, %c0_26], %92 {strides = array<i32>} : memref<1x8x128xf32, #tpu.memory_space<vmem>>, vector<1x8x128xf32>,
    } else {
    }
    return
  }
  func.func @transform_0(%arg0: i32, %arg1: i32) -> (i32, i32) {
    %c1_i32 = arith.constant 1 : i32
    %0 = arith.muli %arg0, %c1_i32 : i32
    %1 = arith.addi %0, %arg1 : i32
    %c0_i32 = arith.constant 0 : i32
    %c0_i32_0 = arith.constant 0 : i32
    return %1, %c0_i32 : i32, i32
  }
  func.func @transform_1(%arg0: i32, %arg1: i32) -> (i32, i32) {
    %c1_i32 = arith.constant 1 : i32
    %0 = arith.muli %arg0, %c1_i32 : i32
    %1 = arith.addi %0, %arg1 : i32
    %c0_i32 = arith.constant 0 : i32
    %c0_i32_0 = arith.constant 0 : i32
    return %1, %c0_i32 : i32, i32
  }
  func.func @transform_2(%arg0: i32, %arg1: i32) -> (i32, i32) {
    %c0_i32 = arith.constant 0 : i32
    %c0_i32_0 = arith.constant 0 : i32
    %c0_i32_1 = arith.constant 0 : i32
    return %c0_i32, %c0_i32_0 : i32, i32
  }
  func.func @transform_3(%arg0: i32, %arg1: i32) -> (i32, i32) {
    %c0_i32 = arith.constant 0 : i32
    %c0_i32_0 = arith.constant 0 : i32
    %c0_i32_1 = arith.constant 0 : i32
    return %c0_i32, %c0_i32_0 : i32, i32
  }
  func.func @transform_4(%arg0: i32, %arg1: i32) -> (i32, i32, i32) {
    %c0_i32 = arith.constant 0 : i32
    %c0_i32_0 = arith.constant 0 : i32
    %c0_i32_1 = arith.constant 0 : i32
    return %arg0, %c0_i32, %c0_i32_0 : i32, i32, i32
  }
}

</mosaic_0001>

<llo_original>
// kernel: furniture_loss.1
$region0: #{furniture_loss.1}
  #allocation0 [shape = 'u32[]', space=smem, size = 0x4, offset = 0x4, fixed_abs, tag = 'smem constant byte address 0x4 - core index']
  #allocation1 [shape = 'u32[72,128]{1,0:T(1,128)}', space=vmem, size = 0x9000, scoped, tag = 'internal scratch']
  #allocation2 [shape = 'f32[8,128]{1,0:T(8,128)}', space=vmem, size = 0x1000, scoped, tag = 'scratch operand']
  %s0 = inlined_call_operand.vmem [shape: f32[16,128], index: 0, kind: input, shape index: {}]
  %s1 = inlined_call_operand.vmem [shape: f32[16,128], index: 1, kind: input, shape index: {}]
  %s2 = inlined_call_operand.vmem [shape: bf16[128,128], index: 2, kind: input, shape index: {}]
  %s3 = inlined_call_operand.vmem [shape: f32[8,128], index: 3, kind: input, shape index: {}]
  %s4 = inlined_call_operand.vmem [shape: f32[1,8,128], index: 4, kind: output, shape index: {}]
  %s5 = sld [smem:[#allocation0]]
  $region34: #{furniture_loss.1} parent=0
    _
  %s7 = ssub.s32 1, %s5
  %s8 = scalar_select 0, %s7, %s5
  // Predicated region
  $region2: #{furniture_loss.1} parent=0 // pred_check
    _
  $region3: #{furniture_loss.1} parent=0 // pred_check_branch
    %10 = sbr.rel (0) target = $region5
  $region4: #{furniture_loss.1} parent=0 // pred_region
    %s11 = sadd.s32 0, 0
    %s12 = smul.u32 2, %s11
    %p13 = scmp.lt.s32.totalorder %s12, 1
    %s14 = scalar_select %p13, %s12, 1
    %s15 = smul.addr %s14, 8
    %s16 = scalar_lea.vmem %s0, %s15
    %s17 = sadd.s32 0, 0
    %s18 = smul.u32 2, %s17
  $region5: #{furniture_loss.1} parent=0 // pred_fallthru
    _
  // Predicated region
  $region6: #{furniture_loss.1} parent=0 // pred_check
    _
  $region7: #{furniture_loss.1} parent=0 // pred_check_branch
    %20 = sbr.rel (0) target = $region9
  $region8: #{furniture_loss.1} parent=0 // pred_region
    %s21 = sadd.s32 0, 0
    %s22 = smul.u32 2, %s21
    %p23 = scmp.lt.s32.totalorder %s22, 1
    %s24 = scalar_select %p23, %s22, 1
    %s25 = smul.addr %s24, 8
    %s26 = scalar_lea.vmem %s1, %s25
    %s27 = sadd.s32 0, 0
    %s28 = smul.u32 2, %s27
  $region9: #{furniture_loss.1} parent=0 // pred_fallthru
    _
  // Predicated region
  $region10: #{furniture_loss.1} parent=0 // pred_check
    _
  $region11: #{furniture_loss.1} parent=0 // pred_check_branch
    %30 = sbr.rel (0) target = $region13
  $region12: #{furniture_loss.1} parent=0 // pred_region
    _
  $region13: #{furniture_loss.1} parent=0 // pred_fallthru
    _
  // Predicated region
  $region14: #{furniture_loss.1} parent=0 // pred_check
    _
  $region15: #{furniture_loss.1} parent=0 // pred_check_branch
    %32 = sbr.rel (0) target = $region17
  $region16: #{furniture_loss.1} parent=0 // pred_region
    _
  $region17: #{furniture_loss.1} parent=0 // pred_fallthru
    _
  %s33 = sadd.s32 0, 0
  %s34 = smul.u32 2, %s33
  %p35 = scmp.lt.s32.totalorder %s34, 1
  %s36 = scalar_select %p35, %s34, 1
  %s37 = smul.addr %s36, 8
  %s38 = scalar_lea.vmem %s0, %s37
  %s39 = sadd.s32 0, 0
  %s40 = smul.u32 2, %s39
  %p41 = scmp.lt.s32.totalorder %s40, 1
  %s42 = scalar_select %p41, %s40, 1
  %s43 = smul.addr %s42, 8
  %s44 = scalar_lea.vmem %s1, %s43
  %s45 = sadd.s32 0, 0
  %s46 = smul.u32 2, %s45
  %p47 = scmp.lt.s32.totalorder %s46, 1
  %s48 = scalar_select %p47, %s46, 1
  %s49 = smul.addr %s48, 8
  %s50 = scalar_lea.vmem %s0, %s49
  %s51 = sadd.s32 0, 0
  %s52 = smul.u32 2, %s51
  %s53 = sadd.s32 0, 0
  %s54 = smul.u32 2, %s53
  %p55 = scmp.lt.s32.totalorder %s54, 1
  %s56 = scalar_select %p55, %s54, 1
  %s57 = smul.addr %s56, 8
  %s58 = scalar_lea.vmem %s1, %s57
  %s59 = sadd.s32 0, 0
  %s60 = smul.u32 2, %s59
  %p61 = scmp.eq.s32.totalorder 0, 0
  // Predicated region
  $region18: #{furniture_loss.1} parent=0 // pred_check
    %p62 = pneg %p61
  $region19: #{furniture_loss.1} parent=0 // pred_check_branch
    %64 = sbr.rel (%p62) target = $region21
  $region20: #{furniture_loss.1} parent=0 // pred_region
    %65 = vst [vmem:[#allocation2] sm:$0xff] 0.0
  $region21: #{furniture_loss.1} parent=0 // pred_fallthru
    _
  %v66 = vld [vmem:[%s50] sm:$0xff]
  %v67 = vld [vmem:[%s50 + $0x8] sm:$0xff]
  %v68 = vld [vmem:[%s58] sm:$0xff]
  %v69 = vld [vmem:[%s58 + $0x8] sm:$0xff]
  %v70 = vld [vmem:[%s2] sm:$0xf]
  %v71 = vld [vmem:[%s2 + $0x4] sm:$0xf]
  %v72 = vld [vmem:[%s2 + $0x8] sm:$0xf]
  %v73 = vld [vmem:[%s2 + $0xc] sm:$0xf]
  %v74 = vld [vmem:[%s2 + $0x10] sm:$0xf]
  %v75 = vld [vmem:[%s2 + $0x14] sm:$0xf]
  %v76 = vld [vmem:[%s2 + $0x18] sm:$0xf]
  %v77 = vld [vmem:[%s2 + $0x1c] sm:$0xf]
  %v78 = vld [vmem:[%s2 + $0x20] sm:$0xf]
  %v79 = vld [vmem:[%s2 + $0x24] sm:$0xf]
  %v80 = vld [vmem:[%s2 + $0x28] sm:$0xf]
  %v81 = vld [vmem:[%s2 + $0x2c] sm:$0xf]
  %v82 = vld [vmem:[%s2 + $0x30] sm:$0xf]
  %v83 = vld [vmem:[%s2 + $0x34] sm:$0xf]
  %v84 = vld [vmem:[%s2 + $0x38] sm:$0xf]
  %v85 = vld [vmem:[%s2 + $0x3c] sm:$0xf]
  %v86 = vld [vmem:[%s3] sm:$0xff]
  %v87 = vmul.f32 %v66, %v68
  %v88 = vmul.f32 %v67, %v69
  %vm89 = vcmp.ne.f32.partialorder %v68, -1.0
  %vm90 = vcmp.ne.f32.partialorder %v69, -1.0
  %v91 = vsel %vm89, 1, 0
  %v92 = vsel %vm90, 1, 0
  %v93 = vcvt.s32.f32 %v91
  %v94 = vcvt.s32.f32 %v92
  %v95 = vperm.slane %v86, 5
  %v96 = vmul.f32 %v95, %v93
  %v97 = vmul.f32 %v95, %v94
  %v98 = vpack.c.bf16 %v96, %v96
  %v99 = vpack.c.bf16 %v97, %v97
  %v100 = vperm.slane %v86, 4
  %v101 = vmul.f32 %v100, %v87
  %v102 = vmul.f32 %v100, %v88
  %v103 = vpack.c.bf16 %v101, %v101
  %v104 = vpack.c.bf16 %v102, %v102
  %v105 = vunpack.c.l.bf16 %v103
  %v106 = vunpack.c.l.bf16 %v104
  %v107 = vsub.f32 %v101, %v105
  %v108 = vsub.f32 %v102, %v106
  %v109 = vpack.c.bf16 %v107, %v107
  %v110 = vpack.c.bf16 %v108, %v108
  %v113 = vunpack.c.l.b16 %v98
  %v114 = vunpack.c.l.b16 %v99
  %v115 = vpack.c.b16 %v114, %v113
  %v119 = vunpack.c.l.b16 %v103
  %v120 = vunpack.c.l.b16 %v104
  %v121 = vpack.c.b16 %v120, %v119
  %v125 = vunpack.c.l.b16 %v109
  %v126 = vunpack.c.l.b16 %v110
  %v127 = vpack.c.b16 %v126, %v125
  %v145 = vunpack.c.l.b16 %v70
  %v146 = vunpack.c.l.b16 %v71
  %v147 = vunpack.c.l.b16 %v72
  %v148 = vunpack.c.l.b16 %v73
  %v149 = vunpack.c.l.b16 %v74
  %v150 = vunpack.c.l.b16 %v75
  %v151 = vunpack.c.l.b16 %v76
  %v152 = vunpack.c.l.b16 %v77
  %v153 = vunpack.c.l.b16 %v78
  %v154 = vunpack.c.l.b16 %v79
  %v155 = vunpack.c.l.b16 %v80
  %v156 = vunpack.c.l.b16 %v81
  %v157 = vunpack.c.l.b16 %v82
  %v158 = vunpack.c.l.b16 %v83
  %v159 = vunpack.c.l.b16 %v84
  %v160 = vunpack.c.l.b16 %v85
  %v161 = vpack.c.b16 %v146, %v145
  %v162 = vpack.c.b16 %v148, %v147
  %v163 = vpack.c.b16 %v150, %v149
  %v164 = vpack.c.b16 %v152, %v151
  %v165 = vpack.c.b16 %v154, %v153
  %v166 = vpack.c.b16 %v156, %v155
  %v167 = vpack.c.b16 %v158, %v157
  %v168 = vpack.c.b16 %v160, %v159
  %177 = vmatpush.bf16.msra.mxu0 %v168
  %178 = vmatpush.bf16.msra.mxu0 %v167
  %179 = vmatpush.bf16.msra.mxu0 %v166
  %180 = vmatpush.bf16.msra.mxu0 %v165
  %181 = vmatpush.bf16.msra.mxu0 %v164
  %182 = vmatpush.bf16.msra.mxu0 %v163
  %183 = vmatpush.bf16.msra.mxu0 %v162
  %184 = vmatpush.bf16.msra.mxu0 %v161
  %185 = vmatmul.bf16.gmra.mxu0 %v115
  %v186 = vpop.f32.mrf.mxu0
  %v187 = vadd.f32 0.0, %v186
  %v188 = vpop.f32.mrf.mxu0
  %v189 = vadd.f32 0.0, %v188
  %190 = vmatmul.bf16.gmra.mxu0 %v121
  %v191 = vpop.f32.mrf.mxu0
  %v192 = vadd.f32 0.0, %v191
  %v193 = vpop.f32.mrf.mxu0
  %v194 = vadd.f32 0.0, %v193
  %195 = vmatmul.bf16.gmra.mxu0 %v127
  %v196 = vpop.f32.mrf.mxu0
  %v197 = vadd.f32 0.0, %v196
  %v198 = vpop.f32.mrf.mxu0
  %v199 = vadd.f32 0.0, %v198
  %200 = vdwg.mxu0
  %v201 = vadd.f32 %v192, %v197
  %v202 = vadd.f32 %v194, %v199
  %v203 = vand.u32 2147483647, %v66
  %v204 = vand.u32 2147483647, %v67
  %v205 = vsub.f32 0.0, %v203
  %v206 = vsub.f32 0.0, %v204
  %v207 = vperm.slane %v86, 1
  %v208 = vmul.f32 %v207, %v205
  %v209 = vmul.f32 %v207, %v206
  %v210 = vsub.f32 %v66, %v201
  %v211 = vsub.f32 %v67, %v202
  %v212 = vmin.f32 %v210, 60.0
  %v213 = vmin.f32 %v211, 60.0
  %v214 = vmul.f32 %v100, %v212
  %v215 = vmul.f32 %v100, %v213
  %v216 = vadd.f32 %v208, %v214
  %v217 = vadd.f32 %v209, %v215
  %v218 = vmul.f32 %v216, 1.442695
  %v219 = vpow.pop %v218
  %v220 = vmul.f32 %v217, 1.442695
  %v221 = vpow.pop %v220
  %v222 = vsub.f32 1.0, %v68
  %v223 = vsub.f32 1.0, %v69
  %v224 = vmul.f32 %v222, %v219
  %v225 = vmul.f32 %v223, %v221
  %v226 = vmul.f32 %v100, %v224
  %v227 = vmul.f32 %v100, %v225
  %v228 = vpack.c.bf16 %v226, %v226
  %v229 = vpack.c.bf16 %v227, %v227
  %v230 = vunpack.c.l.bf16 %v228
  %v231 = vunpack.c.l.bf16 %v229
  %v232 = vsub.f32 %v226, %v230
  %v233 = vsub.f32 %v227, %v231
  %v234 = vpack.c.bf16 %v232, %v232
  %v235 = vpack.c.bf16 %v233, %v233
  %v238 = vunpack.c.l.b16 %v228
  %v239 = vunpack.c.l.b16 %v229
  %v240 = vpack.c.b16 %v239, %v238
  %v244 = vunpack.c.l.b16 %v234
  %v245 = vunpack.c.l.b16 %v235
  %v246 = vpack.c.b16 %v245, %v244
  %248 = vmatpush.bf16.msra.mxu0 %v168
  %249 = vmatpush.bf16.msra.mxu0 %v167
  %250 = vmatpush.bf16.msra.mxu0 %v166
  %251 = vmatpush.bf16.msra.mxu0 %v165
  %252 = vmatpush.bf16.msra.mxu0 %v164
  %253 = vmatpush.bf16.msra.mxu0 %v163
  %254 = vmatpush.bf16.msra.mxu0 %v162
  %255 = vmatpush.bf16.msra.mxu0 %v161
  %256 = vmatmul.bf16.gmra.mxu0 %v240
  %v257 = vpop.f32.mrf.mxu0
  %v258 = vadd.f32 0.0, %v257
  %v259 = vpop.f32.mrf.mxu0
  %v260 = vadd.f32 0.0, %v259
  %261 = vmatmul.bf16.gmra.mxu0 %v246
  %v262 = vpop.f32.mrf.mxu0
  %v263 = vadd.f32 0.0, %v262
  %v264 = vpop.f32.mrf.mxu0
  %v265 = vadd.f32 0.0, %v264
  %266 = vdwg.mxu0
  %v267 = vadd.f32 %v258, %v263
  %v268 = vadd.f32 %v260, %v265
  %v269 = vmul.f32 %v207, %v219
  %v270 = vmul.f32 %v207, %v221
  %v271 = vadd.f32 %v269, 1.0
  %v272 = vadd.f32 %v270, 1.0
  %v273 = vperm.slane %v86, 2
  %v274 = vmul.f32 %v273, %v267
  %v275 = vmul.f32 %v273, %v268
  %v276 = vadd.f32 %v271, %v274
  %v277 = vadd.f32 %v272, %v275
  %v278 = vlog2.pop %v276
  %v279 = vmul.f32 %v278, 0.6931472
  %v280 = vlog2.pop %v277
  %v281 = vmul.f32 %v280, 0.6931472
  %v282 = vsub.f32 %v66, %v68
  %v283 = vsub.f32 %v67, %v69
  %v284 = vmul.f32 %v282, %v282
  %v285 = vmul.f32 %v283, %v283
  %v286 = vperm.slane %v86, 0
  %v287 = vmul.f32 %v286, %v284
  %v288 = vmul.f32 %v286, %v285
  %v289 = vmax.f32 %v66, 0.0
  %v290 = vmax.f32 %v67, 0.0
  %v291 = vsub.f32 %v289, %v87
  %v292 = vsub.f32 %v290, %v88
  %v293 = vmul.f32 %v207, %v291
  %v294 = vmul.f32 %v207, %v292
  %v295 = vadd.f32 %v287, %v293
  %v296 = vadd.f32 %v288, %v294
  %v297 = vperm.slane %v86, 3
  %v298 = vadd.f32 %v295, %v297
  %v299 = vadd.f32 %v296, %v297
  %v300 = vadd.f32 %v298, %v279
  %v301 = vadd.f32 %v299, %v281
  %v302 = vld [vmem:[#allocation2] sm:$0xff]
  %v303 = vmul.f32 %v187, %v300
  %v304 = vmul.f32 %v189, %v301
  %v305 = vadd.f32 %v303, %v304
  %v306 = vadd.f32 %v302, %v305
  %307 = vst [vmem:[#allocation2] sm:$0xff] %v306
  // Predicated region
  $region22: #{furniture_loss.1} parent=0 // pred_check
    %p308 = pneg %p61
  $region23: #{furniture_loss.1} parent=0 // pred_check_branch
    %310 = sbr.rel (%p308) target = $region25
  $region24: #{furniture_loss.1} parent=0 // pred_region
    %v311 = vld [vmem:[#allocation2] sm:$0xff]
    %312 = vst [vmem:[%s4] sm:$0xff] %v311
  $region25: #{furniture_loss.1} parent=0 // pred_fallthru
    _
  // Predicated region
  $region26: #{furniture_loss.1} parent=0 // pred_check
    _
  $region27: #{furniture_loss.1} parent=0 // pred_check_branch
    %314 = sbr.rel (0) target = $region29
  $region28: #{furniture_loss.1} parent=0 // pred_region
    _
  $region29: #{furniture_loss.1} parent=0 // pred_fallthru
    _
  // Predicated region
  $region30: #{furniture_loss.1} parent=0 // pred_check
    _
  $region31: #{furniture_loss.1} parent=0 // pred_check_branch
    %316 = sbr.rel (0) target = $region33
  $region32: #{furniture_loss.1} parent=0 // pred_region
    _
  $region33: #{furniture_loss.1} parent=0 // pred_fallthru
    _

</llo_original>
